<compile_context>
chip_gen: v5e
topology: v5e:2x2
jax: 0.10.0
libtpu: 0.0.40
codegen_flags: <defaults>
</compile_context>

<pallas_src>
import functools

import jax
import jax.numpy as jnp
import numpy as np
from jax.experimental import pallas as pl
from jax.experimental.pallas import tpu as pltpu


# ----------------------------- Pallas kernel -------------------------------

def _down_conv_fused_kernel(p_ref, w_ref, par_ref,
                            out_ref, mean_ref, var_ref,
                            sum_sc, ssq_sc, scale_sc, shift_sc,
                            *, eps, inv_m):
    """Fused Conv3d(2,2) + BatchNorm3d(train) + PReLU.

    grid = (phase, n, j), phase slowest:
      phase 0: y^T = W^T(Cout,K) @ P^T(K,tm) on the MXU; accumulate per-channel
               sum / sum-of-squares into (Cout,1) VMEM scratch. Nothing is stored.
      phase 1: recompute the same y^T tile (re-streamed P^T block + one matmul),
               apply BN with scale/shift hoisted into scratch at the first phase-1
               step, apply PReLU and store the lane-dense (Cout, tm) block.
    """
    ph = pl.program_id(0)
    n = pl.program_id(1)
    j = pl.program_id(2)
    first = jnp.logical_and(n == 0, j == 0)

    @pl.when(jnp.logical_and(ph == 0, first))
    def _init():
        sum_sc[...] = jnp.zeros_like(sum_sc)
        ssq_sc[...] = jnp.zeros_like(ssq_sc)

    # Conv as a lane-dense matmul: (Cout, K) @ (K, tm) -> (Cout, tm), f32 accumulation.
    # Recomputed in phase 1 instead of keeping a full-resolution Y^T VMEM scratch.
    y = jnp.dot(w_ref[...], p_ref[...], preferred_element_type=jnp.float32)

    @pl.when(ph == 0)
    def _stats():
        # Per-channel batch statistics: lane (XLU) reductions into (Cout, 1).
        sum_sc[...] += jnp.sum(y, axis=1, keepdims=True)
        ssq_sc[...] += jnp.sum(y * y, axis=1, keepdims=True)

    @pl.when(jnp.logical_and(ph == 1, first))
    def _finalize_stats():
        mean = sum_sc[...] * inv_m
        # Single-pass var = E[y^2] - E[y]^2 in f32 (conv bias removed in-kernel keeps the
        # per-channel mean small); clamp guards tiny negative values from cancellation.
        var = jnp.maximum(ssq_sc[...] * inv_m - mean * mean, 0.0)
        inv_std = jax.lax.rsqrt(var + eps)
        gamma = par_ref[:, 0:1]
        beta = par_ref[:, 1:2]
        scale = gamma * inv_std
        scale_sc[...] = scale
        shift_sc[...] = beta - mean * scale
        mean_ref[...] = mean       # exported batch stats (bias-less conv output)
        var_ref[...] = var

    @pl.when(ph == 1)
    def _bn_prelu():
        alpha = par_ref[:, 2:3]
        z = y * scale_sc[...] + shift_sc[...]
        out_ref[...] = jnp.where(z >= 0.0, z, alpha * z).astype(out_ref.dtype)


# ------------------------------- wrapper -----------------------------------

def down_conv_forward(x, conv_w, conv_b, bn_gamma, bn_beta, prelu_alpha,
                      *, eps=1e-5, tm=None, operand_dtype=jnp.bfloat16,
                      return_batch_stats=False):
    """x: (N, C_in, D, H, W) float32 -> (N, C_out, D//2, H//2, W//2)."""
    N, Cin, D, H, W = x.shape
    Cout = conv_w.shape[0]
    assert D % 2 == 0 and H % 2 == 0 and W % 2 == 0
    Do, Ho, Wo = D // 2, H // 2, W // 2
    K = Cin * 8
    Mb = Do * Ho * Wo            # output voxels per batch element
    M = N * Mb                   # total voxels per channel (BatchNorm reduction size)
    assert Mb % 128 == 0, "per-batch output voxel count must be lane aligned"

    if tm is None:  # largest lane-aligned tile that divides the per-batch voxel count
        tm = next(t for t in (8192, 4096, 2048, 1024, 512, 256, 128) if Mb % t == 0)
    assert Mb % tm == 0 and tm % 128 == 0
    jb = Mb // tm

    # --- patchify: ONE fused XLA reshape+transpose+cast producing P^T (K, M) in bf16 ---
    # Column order is n-major then (do,ho,wo) raster, matching the NCDHW output blocks.
    # TODO(synk): fully fusing this 2x2x2 stride-2 unfold into the kernel needs either sub-(8,128) tap blocks (rejected by BlockSpec's last-two-dims rule) or an in-kernel (Cin,td,Ho,Wo)->(Cin,tm) lane relayout; until that Mosaic reshape path is validated it stays as this single XLA op (x read once, bf16 patch matrix written once).
    xp = x.reshape(N, Cin, Do, 2, Ho, 2, Wo, 2)
    p_t = xp.transpose(1, 3, 5, 7, 0, 2, 4, 6).reshape(K, M).astype(operand_dtype)

    # PyTorch conv weight (Cout, Cin, 2, 2, 2) -> (Cout, K)
    w_t = conv_w.reshape(Cout, K).astype(operand_dtype)

    # Conv bias cancels exactly under training-mode BN -> dropped in-kernel; it is added
    # back to the exported batch mean below so running-stat updates stay PyTorch-exact.
    params = jnp.stack([bn_gamma, bn_beta, prelu_alpha], axis=1).astype(jnp.float32)

    kernel = functools.partial(_down_conv_fused_kernel,
                               eps=float(eps), inv_m=1.0 / M)

    out_flat, mean, var = pl.pallas_call(
        kernel,
        out_shape=(
            jax.ShapeDtypeStruct((N, Cout, Mb), jnp.float32),   # NC(DHW): free final reshape
            jax.ShapeDtypeStruct((Cout, 1), jnp.float32),       # batch mean (bias-less y)
            jax.ShapeDtypeStruct((Cout, 1), jnp.float32),       # biased batch variance
        ),
        grid_spec=pltpu.PrefetchScalarGridSpec(
            num_scalar_prefetch=0,
            grid=(2, N, jb),   # (phase, batch, M-tile); phase is the slowest axis
            in_specs=[
                # Patch tiles are streamed in BOTH phases (phase 1 recomputes the conv).
                pl.BlockSpec((K, tm), lambda ph, n, j: (0, n * jb + j)),
                pl.BlockSpec((Cout, K), lambda ph, n, j: (0, 0)),
                pl.BlockSpec((Cout, 3), lambda ph, n, j: (0, 0)),
            ],
            out_specs=[
                # Pinned to block (0,0,0) through phase 0 (never written there) and only
                # advancing in phase 1, so the first write-back happens after the first
                # phase-1 store; block indices never revisit a block once left.
                pl.BlockSpec((None, Cout, tm), lambda ph, n, j: (n * ph, 0, j * ph)),
                pl.BlockSpec((Cout, 1), lambda ph, n, j: (0, 0)),
                pl.BlockSpec((Cout, 1), lambda ph, n, j: (0, 0)),
            ],
            scratch_shapes=[
                pltpu.VMEM((Cout, 1), jnp.float32),   # sum
                pltpu.VMEM((Cout, 1), jnp.float32),   # sum of squares
                pltpu.VMEM((Cout, 1), jnp.float32),   # hoisted BN scale
                pltpu.VMEM((Cout, 1), jnp.float32),   # hoisted BN shift
            ],
        ),
        compiler_params=pltpu.CompilerParams(
            # All grid axes carry sequential state (batch statistics) -> arbitrary.
            # TODO(synk): on v7x, split the M axis across the 2 TensorCores with per-core partial sum/ssq combined in the wrapper for up to ~2x on this HBM-bound loop.
            dimension_semantics=("arbitrary", "arbitrary", "arbitrary"),
            # 48 MiB: safe on v7x (64 MiB VMEM), generous headroom on v5e/v6e (128 MiB).
            vmem_limit_bytes=48 * 1024 * 1024,
        ),
    )(p_t, w_t, params)

    out = out_flat.reshape(N, Cout, Do, Ho, Wo).astype(x.dtype)  # free metadata reshape
    if return_batch_stats:
        batch_mean = mean[:, 0] + conv_b          # re-add the conv bias dropped in-kernel
        batch_var = var[:, 0]                     # biased; scale by M/(M-1) for running_var
        return out, batch_mean, batch_var
    return out


# ------------------------------- reference ---------------------------------

def down_conv_reference(x, conv_w, conv_b, bn_gamma, bn_beta, prelu_alpha,
                        *, eps=1e-5, operand_dtype=jnp.float32,
                        return_batch_stats=False):
    """Plain-JAX reference with the same mixed-precision policy as the kernel."""
    N, Cin, D, H, W = x.shape
    Cout = conv_w.shape[0]
    Do, Ho, Wo = D // 2, H // 2, W // 2
    xp = x.reshape(N, Cin, Do, 2, Ho, 2, Wo, 2)
    xp = xp.transpose(0, 2, 4, 6, 1, 3, 5, 7).reshape(-1, Cin * 8)
    w = conv_w.reshape(Cout, -1).T
    y = jnp.dot(xp.astype(operand_dtype), w.astype(operand_dtype),
                preferred_element_type=jnp.float32,
                precision=jax.lax.Precision.HIGHEST) + conv_b[None, :]
    mean = y.mean(axis=0, keepdims=True)
    var = ((y - mean) ** 2).mean(axis=0, keepdims=True)     # biased batch var
    z = (y - mean) / jnp.sqrt(var + eps) * bn_gamma[None, :] + bn_beta[None, :]
    out = jnp.where(z >= 0, z, prelu_alpha[None, :] * z)
    out = out.reshape(N, Do, Ho, Wo, Cout).transpose(0, 4, 1, 2, 3)
    if return_batch_stats:
        return out, mean[0], var[0]
    return out


# --------------------------------- main -------------------------------------

if __name__ == "__main__":
    key = jax.random.PRNGKey(0)
    k_x, k_w, k_b = jax.random.split(key, 3)

    N, Cin, Cout = 2, 4, 8
    D = H = W = 16

    x = jax.random.normal(k_x, (N, Cin, D, H, W), dtype=jnp.float32)

    # Deterministic parameter init (shapes match the PyTorch module).
    fan_in = Cin * 2 * 2 * 2
    conv_w = jax.random.normal(k_w, (Cout, Cin, 2, 2, 2), jnp.float32) / jnp.sqrt(fan_in)
    conv_b = jax.random.normal(k_b, (Cout,), jnp.float32) * 0.1
    bn_gamma = jnp.ones((Cout,), jnp.float32)           # BatchNorm3d weight init
    bn_beta = jnp.zeros((Cout,), jnp.float32)           # BatchNorm3d bias init
    prelu_alpha = jnp.full((Cout,), 0.25, jnp.float32)  # PReLU(ch_out) init

    # bf16 matmul operands (f32 accumulation); use jnp.float32 to bit-match fp32 closely.
    operand_dtype = jnp.bfloat16

    out, mean, var = down_conv_forward(
        x, conv_w, conv_b, bn_gamma, bn_beta, prelu_alpha,
        operand_dtype=operand_dtype, return_batch_stats=True)
    out = jax.block_until_ready(out)

    ref_out, ref_mean, ref_var = down_conv_reference(
        x, conv_w, conv_b, bn_gamma, bn_beta, prelu_alpha,
        operand_dtype=operand_dtype, return_batch_stats=True)

    np.testing.assert_allclose(np.asarray(out), np.asarray(ref_out),
                               rtol=2e-3, atol=2e-3)
    np.testing.assert_allclose(np.asarray(mean), np.asarray(ref_mean),
                               rtol=2e-2, atol=2e-2)
    np.testing.assert_allclose(np.asarray(var), np.asarray(ref_var),
                               rtol=2e-2, atol=2e-2)
    assert out.shape == (N, Cout, D // 2, H // 2, W // 2)
    print("KERNEL_OK")
</pallas_src>

<mosaic_0001>
module attributes {stable_mosaic.version = 11 : i64} {
  func.func @_down_conv_fused_kernel(%arg0: i32, %arg1: i32, %arg2: i32, %arg3: memref<32x512xbf16, #tpu.memory_space<vmem>>, %arg4: memref<8x32xbf16, #tpu.memory_space<vmem>>, %arg5: memref<8x3xf32, #tpu.memory_space<vmem>>, %arg6: memref<1x8x512xf32, #tpu.memory_space<vmem>>, %arg7: memref<8x1xf32, #tpu.memory_space<vmem>>, %arg8: memref<8x1xf32, #tpu.memory_space<vmem>>, %arg9: memref<8x1xf32, #tpu.memory_space<vmem>>, %arg10: memref<8x1xf32, #tpu.memory_space<vmem>>, %arg11: memref<8x1xf32, #tpu.memory_space<vmem>>, %arg12: memref<8x1xf32, #tpu.memory_space<vmem>>) attributes {dimension_semantics = [#tpu.dimension_semantics<arbitrary>, #tpu.dimension_semantics<arbitrary>, #tpu.dimension_semantics<arbitrary>], iteration_bounds = array<i64: 2, 2, 1>, scalar_prefetch = 0 : i64, scratch_operands = 4 : i64, tpu.core_type = #tpu.core_type<tc>, window_params = [{transform_indices = @transform_0, window_bounds = array<i64: 32, 512>}, {pipeline_mode = #tpu.pipeline_mode<synchronous>, transform_indices = @transform_1, window_bounds = array<i64: 8, 32>}, {pipeline_mode = #tpu.pipeline_mode<synchronous>, transform_indices = @transform_2, window_bounds = array<i64: 8, 3>}, {transform_indices = @transform_3, window_bounds = array<i64: 1, 8, 512>}, {pipeline_mode = #tpu.pipeline_mode<synchronous>, transform_indices = @transform_4, window_bounds = array<i64: 8, 1>}, {pipeline_mode = #tpu.pipeline_mode<synchronous>, transform_indices = @transform_5, window_bounds = array<i64: 8, 1>}]} {
    %c0_i32 = arith.constant 0 : i32
    %0 = arith.cmpi eq, %arg1, %c0_i32 : i32
    %c0_i32_0 = arith.constant 0 : i32
    %1 = arith.cmpi eq, %arg2, %c0_i32_0 : i32
    %2 = arith.andi %0, %1 : i1
    %c0_i32_1 = arith.constant 0 : i32
    %3 = arith.cmpi eq, %arg0, %c0_i32_1 : i32
    %4 = arith.andi %3, %2 : i1
    %5 = arith.extui %4 : i1 to i32
    %c0_i32_2 = arith.constant 0 : i32
    %6 = arith.cmpi ne, %5, %c0_i32_2 : i32
    scf.if %6 {
      %cst_11 = arith.constant 0.000000e+00 : f32
      %20 = vector.broadcast %cst_11 : f32 to vector<8x1xf32>
      %c0_12 = arith.constant 0 : index
      %c0_13 = arith.constant 0 : index
      %21 = vector.load %arg9[%c0_12, %c0_13] : memref<8x1xf32, #tpu.memory_space<vmem>>, vector<8x1xf32>
      tpu.vector_store %arg9[%c0_12, %c0_13], %20 {strides = array<i32>} : memref<8x1xf32, #tpu.memory_space<vmem>>, vector<8x1xf32>,
      %cst_14 = arith.constant 0.000000e+00 : f32
      %22 = vector.broadcast %cst_14 : f32 to vector<8x1xf32>
      %c0_15 = arith.constant 0 : index
      %c0_16 = arith.constant 0 : index
      %23 = vector.load %arg10[%c0_15, %c0_16] : memref<8x1xf32, #tpu.memory_space<vmem>>, vector<8x1xf32>
      tpu.vector_store %arg10[%c0_15, %c0_16], %22 {strides = array<i32>} : memref<8x1xf32, #tpu.memory_space<vmem>>, vector<8x1xf32>,
    } else {
    }
    %c0 = arith.constant 0 : index
    %c0_3 = arith.constant 0 : index
    %7 = vector.load %arg4[%c0, %c0_3] : memref<8x32xbf16, #tpu.memory_space<vmem>>, vector<8x32xbf16>
    %c0_4 = arith.constant 0 : index
    %c0_5 = arith.constant 0 : index
    %8 = vector.load %arg3[%c0_4, %c0_5] : memref<32x512xbf16, #tpu.memory_space<vmem>>, vector<32x512xbf16>
    %cst = arith.constant dense<0.000000e+00> : vector<8x512xf32>
    %9 = tpu.matmul %7, %8, %cst {dimension_numbers = #tpu.dot_dimension_numbers<[1], [0], [0], [1], [0, 0, 1, 1], [], []>} : vector<8x32xbf16>, vector<32x512xbf16>, vector<8x512xf32> -> vector<8x512xf32>
    %c0_i32_6 = arith.constant 0 : i32
    %10 = arith.cmpi eq, %arg0, %c0_i32_6 : i32
    %11 = arith.extui %10 : i1 to i32
    %c0_i32_7 = arith.constant 0 : i32
    %12 = arith.cmpi ne, %11, %c0_i32_7 : i32
    scf.if %12 {
      %c0_11 = arith.constant 0 : index
      %c0_12 = arith.constant 0 : index
      %20 = vector.load %arg9[%c0_11, %c0_12] : memref<8x1xf32, #tpu.memory_space<vmem>>, vector<8x1xf32>
      %cst_13 = arith.constant dense<0.000000e+00> : vector<8xf32>
      %21 = vector.multi_reduction <add>, %9, %cst_13 [1] : vector<8x512xf32> to vector<8xf32>
      %22 = vector.shape_cast %21 : vector<8xf32> to vector<8x1xf32>
      %23 = arith.addf %20, %22 : vector<8x1xf32>
      %c0_14 = arith.constant 0 : index
      %c0_15 = arith.constant 0 : index
      %24 = vector.load %arg9[%c0_14, %c0_15] : memref<8x1xf32, #tpu.memory_space<vmem>>, vector<8x1xf32>
      tpu.vector_store %arg9[%c0_14, %c0_15], %23 {strides = array<i32>} : memref<8x1xf32, #tpu.memory_space<vmem>>, vector<8x1xf32>,
      %c0_16 = arith.constant 0 : index
      %c0_17 = arith.constant 0 : index
      %25 = vector.load %arg10[%c0_16, %c0_17] : memref<8x1xf32, #tpu.memory_space<vmem>>, vector<8x1xf32>
      %26 = arith.mulf %9, %9 : vector<8x512xf32>
      %cst_18 = arith.constant dense<0.000000e+00> : vector<8xf32>
      %27 = vector.multi_reduction <add>, %26, %cst_18 [1] : vector<8x512xf32> to vector<8xf32>
      %28 = vector.shape_cast %27 : vector<8xf32> to vector<8x1xf32>
      %29 = arith.addf %25, %28 : vector<8x1xf32>
      %c0_19 = arith.constant 0 : index
      %c0_20 = arith.constant 0 : index
      %30 = vector.load %arg10[%c0_19, %c0_20] : memref<8x1xf32, #tpu.memory_space<vmem>>, vector<8x1xf32>
      tpu.vector_store %arg10[%c0_19, %c0_20], %29 {strides = array<i32>} : memref<8x1xf32, #tpu.memory_space<vmem>>, vector<8x1xf32>,
    } else {
    }
    %c1_i32 = arith.constant 1 : i32
    %13 = arith.cmpi eq, %arg0, %c1_i32 : i32
    %14 = arith.andi %13, %2 : i1
    %15 = arith.extui %14 : i1 to i32
    %c0_i32_8 = arith.constant 0 : i32
    %16 = arith.cmpi ne, %15, %c0_i32_8 : i32
    scf.if %16 {
      %c0_11 = arith.constant 0 : index
      %c0_12 = arith.constant 0 : index
      %20 = vector.load %arg9[%c0_11, %c0_12] : memref<8x1xf32, #tpu.memory_space<vmem>>, vector<8x1xf32>
      %cst_13 = arith.constant 9.765625E-4 : f32
      %21 = vector.broadcast %cst_13 : f32 to vector<8x1xf32>
      %22 = arith.mulf %20, %21 : vector<8x1xf32>
      %c0_14 = arith.constant 0 : index
      %c0_15 = arith.constant 0 : index
      %23 = vector.load %arg10[%c0_14, %c0_15] : memref<8x1xf32, #tpu.memory_space<vmem>>, vector<8x1xf32>
      %cst_16 = arith.constant 9.765625E-4 : f32
      %24 = vector.broadcast %cst_16 : f32 to vector<8x1xf32>
      %25 = arith.mulf %23, %24 : vector<8x1xf32>
      %26 = arith.mulf %22, %22 : vector<8x1xf32>
      %27 = arith.subf %25, %26 : vector<8x1xf32>
      %cst_17 = arith.constant 0.000000e+00 : f32
      %28 = vector.broadcast %cst_17 : f32 to vector<8x1xf32>
      %29 = arith.maximumf %27, %28 : vector<8x1xf32>
      %cst_18 = arith.constant 9.99999974E-6 : f32
      %30 = vector.broadcast %cst_18 : f32 to vector<8x1xf32>
      %31 = arith.addf %29, %30 : vector<8x1xf32>
      %32 = math.rsqrt %31 : vector<8x1xf32>
      %c0_19 = arith.constant 0 : index
      %c0_20 = arith.constant 0 : index
      %33 = vector.load %arg5[%c0_19, %c0_20] : memref<8x3xf32, #tpu.memory_space<vmem>>, vector<8x1xf32>
      %c0_21 = arith.constant 0 : index
      %c1 = arith.constant 1 : index
      %34 = vector.load %arg5[%c0_21, %c1] : memref<8x3xf32, #tpu.memory_space<vmem>>, vector<8x1xf32>
      %35 = arith.mulf %33, %32 : vector<8x1xf32>
      %c0_22 = arith.constant 0 : index
      %c0_23 = arith.constant 0 : index
      %36 = vector.load %arg11[%c0_22, %c0_23] : memref<8x1xf32, #tpu.memory_space<vmem>>, vector<8x1xf32>
      tpu.vector_store %arg11[%c0_22, %c0_23], %35 {strides = array<i32>} : memref<8x1xf32, #tpu.memory_space<vmem>>, vector<8x1xf32>,
      %37 = arith.mulf %22, %35 : vector<8x1xf32>
      %38 = arith.subf %34, %37 : vector<8x1xf32>
      %c0_24 = arith.constant 0 : index
      %c0_25 = arith.constant 0 : index
      %39 = vector.load %arg12[%c0_24, %c0_25] : memref<8x1xf32, #tpu.memory_space<vmem>>, vector<8x1xf32>
      tpu.vector_store %arg12[%c0_24, %c0_25], %38 {strides = array<i32>} : memref<8x1xf32, #tpu.memory_space<vmem>>, vector<8x1xf32>,
      %c0_26 = arith.constant 0 : index
      %c0_27 = arith.constant 0 : index
      %40 = vector.load %arg7[%c0_26, %c0_27] : memref<8x1xf32, #tpu.memory_space<vmem>>, vector<8x1xf32>
      tpu.vector_store %arg7[%c0_26, %c0_27], %22 {strides = array<i32>} : memref<8x1xf32, #tpu.memory_space<vmem>>, vector<8x1xf32>,
      %c0_28 = arith.constant 0 : index
      %c0_29 = arith.constant 0 : index
      %41 = vector.load %arg8[%c0_28, %c0_29] : memref<8x1xf32, #tpu.memory_space<vmem>>, vector<8x1xf32>
      tpu.vector_store %arg8[%c0_28, %c0_29], %29 {strides = array<i32>} : memref<8x1xf32, #tpu.memory_space<vmem>>, vector<8x1xf32>,
    } else {
    }
    %c1_i32_9 = arith.constant 1 : i32
    %17 = arith.cmpi eq, %arg0, %c1_i32_9 : i32
    %18 = arith.extui %17 : i1 to i32
    %c0_i32_10 = arith.constant 0 : i32
    %19 = arith.cmpi ne, %18, %c0_i32_10 : i32
    scf.if %19 {
      %c0_11 = arith.constant 0 : index
      %c2 = arith.constant 2 : index
      %20 = vector.load %arg5[%c0_11, %c2] : memref<8x3xf32, #tpu.memory_space<vmem>>, vector<8x1xf32>
      %c0_12 = arith.constant 0 : index
      %c0_13 = arith.constant 0 : index
      %21 = vector.load %arg11[%c0_12, %c0_13] : memref<8x1xf32, #tpu.memory_space<vmem>>, vector<8x1xf32>
      %22 = vector.broadcast %21 : vector<8x1xf32> to vector<8x512xf32>
      %23 = arith.mulf %9, %22 : vector<8x512xf32>
      %c0_14 = arith.constant 0 : index
      %c0_15 = arith.constant 0 : index
      %24 = vector.load %arg12[%c0_14, %c0_15] : memref<8x1xf32, #tpu.memory_space<vmem>>, vector<8x1xf32>
      %25 = vector.broadcast %24 : vector<8x1xf32> to vector<8x512xf32>
      %26 = arith.addf %23, %25 : vector<8x512xf32>
      %cst_16 = arith.constant 0.000000e+00 : f32
      %27 = vector.broadcast %cst_16 : f32 to vector<8x512xf32>
      %28 = arith.cmpf oge, %26, %27 : vector<8x512xf32>
      %29 = vector.broadcast %20 : vector<8x1xf32> to vector<8x512xf32>
      %30 = arith.mulf %29, %26 : vector<8x512xf32>
      %31 = arith.select %28, %26, %30 : vector<8x512xi1>, vector<8x512xf32>
      %c0_17 = arith.constant 0 : index
      %c0_18 = arith.constant 0 : index
      %c0_19 = arith.constant 0 : index
      %32 = vector.load %arg6[%c0_17, %c0_18, %c0_19] : memref<1x8x512xf32, #tpu.memory_space<vmem>>, vector<1x8x512xf32>
      %33 = vector.shape_cast %32 : vector<1x8x512xf32> to vector<8x512xf32>
      %34 = vector.shape_cast %31 : vector<8x512xf32> to vector<1x8x512xf32>
      tpu.vector_store %arg6[%c0_17, %c0_18, %c0_19], %34 {strides = array<i32>} : memref<1x8x512xf32, #tpu.memory_space<vmem>>, vector<1x8x512xf32>,
    } else {
    }
    return
  }
  func.func @transform_0(%arg0: i32, %arg1: i32, %arg2: i32) -> (i32, i32) {
    %c1_i32 = arith.constant 1 : i32
    %0 = arith.muli %arg1, %c1_i32 : i32
    %1 = arith.addi %0, %arg2 : i32
    %c0_i32 = arith.constant 0 : i32
    %c0_i32_0 = arith.constant 0 : i32
    return %c0_i32, %1 : i32, i32
  }
  func.func @transform_1(%arg0: i32, %arg1: i32, %arg2: i32) -> (i32, i32) {
    %c0_i32 = arith.constant 0 : i32
    %c0_i32_0 = arith.constant 0 : i32
    %c0_i32_1 = arith.constant 0 : i32
    return %c0_i32, %c0_i32_0 : i32, i32
  }
  func.func @transform_2(%arg0: i32, %arg1: i32, %arg2: i32) -> (i32, i32) {
    %c0_i32 = arith.constant 0 : i32
    %c0_i32_0 = arith.constant 0 : i32
    %c0_i32_1 = arith.constant 0 : i32
    return %c0_i32, %c0_i32_0 : i32, i32
  }
  func.func @transform_3(%arg0: i32, %arg1: i32, %arg2: i32) -> (i32, i32, i32) {
    %0 = arith.muli %arg1, %arg0 : i32
    %1 = arith.muli %arg2, %arg0 : i32
    %c0_i32 = arith.constant 0 : i32
    %c0_i32_0 = arith.constant 0 : i32
    return %0, %c0_i32, %1 : i32, i32, i32
  }
  func.func @transform_4(%arg0: i32, %arg1: i32, %arg2: i32) -> (i32, i32) {
    %c0_i32 = arith.constant 0 : i32
    %c0_i32_0 = arith.constant 0 : i32
    %c0_i32_1 = arith.constant 0 : i32
    return %c0_i32, %c0_i32_0 : i32, i32
  }
  func.func @transform_5(%arg0: i32, %arg1: i32, %arg2: i32) -> (i32, i32) {
    %c0_i32 = arith.constant 0 : i32
    %c0_i32_0 = arith.constant 0 : i32
    %c0_i32_1 = arith.constant 0 : i32
    return %c0_i32, %c0_i32_0 : i32, i32
  }
}

</mosaic_0001>

<llo_original>
// kernel: tpu_custom_call.1
$region0: #{tpu_custom_call.1}
  #allocation0 [shape = 'u32[]', space=smem, size = 0x4, offset = 0x4, fixed_abs, tag = 'smem constant byte address 0x4 - core index']
  #allocation1 [shape = 'u32[72,128]{1,0:T(1,128)}', space=vmem, size = 0x9000, scoped, tag = 'internal scratch']
  #allocation2 [shape = 'f32[8,1]{1,0:T(8,128)}', space=vmem, size = 0x1000, scoped, tag = 'scratch operand']
  #allocation3 [shape = 'f32[8,1]{1,0:T(8,128)}', space=vmem, size = 0x1000, scoped, tag = 'scratch operand']
  #allocation4 [shape = 'f32[8,1]{1,0:T(8,128)}', space=vmem, size = 0x1000, scoped, tag = 'scratch operand']
  #allocation5 [shape = 'f32[8,1]{1,0:T(8,128)}', space=vmem, size = 0x1000, scoped, tag = 'scratch operand']
  %s0 = inlined_call_operand.hbm [shape: bf16[32,1024], index: 0, kind: input, shape index: {}]
  %s1 = inlined_call_operand.vmem [shape: bf16[8,32], index: 1, kind: input, shape index: {}]
  %s2 = inlined_call_operand.vmem [shape: f32[8,3], index: 2, kind: input, shape index: {}]
  %s3 = inlined_call_operand.hbm [shape: f32[2,8,512], index: 3, kind: output, shape index: {0}]
  %s4 = inlined_call_operand.vmem [shape: f32[8,1], index: 4, kind: output, shape index: {1}]
  %s5 = inlined_call_operand.vmem [shape: f32[8,1], index: 5, kind: output, shape index: {2}]
  %6 = xla_tuple %s3, %s4, %s5
  %s7 = sld [smem:[#allocation0]]
  $region81: #{tpu_custom_call.1} parent=0
    _
  %s9 = ssub.s32 1, %s7
  %s10 = scalar_select 0, %s9, %s7
  $region1: #{tpu_custom_call.1} parent=0
    #allocation6 [shape = 'u8[65536]{0}', space=vmem, size = 0x10000, scoped, tag = 'input window, operand 0']
    #allocation7 [shape = 's32[2]{0}', space=sflag, size = 0x8, scoped, tag = 'scoped memory for tpu_custom_call.1']
    #allocation8 [shape = 's32[2]{0}', space=sflag, size = 0x8, scoped, tag = 'scoped memory for tpu_custom_call.1']
    #allocation9 [shape = 'u8[32768]{0}', space=vmem, size = 0x8000, scoped, tag = 'output window, operand 0']
    %11 = vsyncpa [#allocation7], 0
    %s12 = scalar_lea.sflag [#allocation7], 1
    %13 = vsyncpa %s12, 0
    %14 = vsyncpa [#allocation8], 0
    %s15 = scalar_lea.sflag [#allocation8], 1
    %16 = vsyncpa %s15, 0
    loop: start=0, step=1, limit=6
    $region2: #{tpu_custom_call.1} parent=1 // loop_pre_header
      _
    $region3: #{tpu_custom_call.1} parent=1 // loop_header
      %s18 = sphi 0, %s22
      %p19 = scmp.ge.s32.totalorder %s18, 6
      %s25 = sphi 0, %s44
      %s26 = sphi 0, %s40
      %s27 = sphi 0, %s36
      %s28 = sphi 0, %s25
      %s29 = sphi 0, %s26
      %s30 = sphi 0, %s27
      %s31 = sphi 0, %s28
      %s32 = sphi 0, %s29
      %s33 = sphi 0, %s30
      %s49 = sphi 0, %s51
      %s52 = sphi 0, %s49
      %s53 = sphi 0, %s52
      %s69 = sphi 0, %s53
      %s73 = sphi 0, %s73
      %s75 = sphi 0, %s73
      %s76 = sphi 0, %s75
      %s90 = sphi 0, %s76
      %s94 = sphi 0, %s94
      %s96 = sphi 0, %s94
      %s97 = sphi 0, %s96
      %s111 = sphi 0, %s97
      %s123 = sphi 0, %s125
      %s126 = sphi 0, %s123
      %s127 = sphi 0, %s126
      %s143 = sphi 0, %s127
      %s147 = sphi 0, %s147
      %s149 = sphi 0, %s147
      %s150 = sphi 0, %s149
      %s164 = sphi 0, %s150
      %s168 = sphi 0, %s168
      %s170 = sphi 0, %s168
      %s171 = sphi 0, %s170
      %s185 = sphi 0, %s171
    $region4: #{tpu_custom_call.1} parent=1 // loop_header_branch
      %21 = sbr.rel (%p19) target = $region8
    $region5: #{tpu_custom_call.1} parent=1 // loop_body
      %s23 = ssub.s32 %s18, 1
      %s24 = ssub.s32 %s18, 2
      %s34 = sadd.s32 1, %s27
      %p35 = scmp.ge.s32.totalorder %s34, 1
      %s36 = scalar_select %p35, 0, %s34
      %s37 = sadd.s32 1, %s26
      %s38 = scalar_select %p35, %s37, %s26
      %p39 = scmp.ge.s32.totalorder %s38, 2
      %s40 = scalar_select %p39, 0, %s38
      %s41 = sadd.s32 1, %s25
      %s42 = scalar_select %p39, %s41, %s25
      %p43 = scmp.ge.s32.totalorder %s42, 2
      %s44 = scalar_select %p43, 0, %s42
      %s45 = sadd.s32 %s26, %s27
      %s46 = sadd.s32 %s40, %s36
      %s47 = ssub.s32 %s45, %s46
      %p48 = scmp.eq.s32.totalorder %s47, 0
      %s50 = sadd.s32 %s49, 1
      %s51 = scalar_select %p48, %s49, %s50
      %p54 = pneg %p48
      %p55 = scmp.eq.s32.totalorder %s18, 3
      %p56 = por %p54, %p55
      %p57 = scmp.ne.s32.totalorder %s49, %s52
      %p58 = scmp.eq.s32.totalorder %s18, 0
      %p59 = por %p57, %p58
      %p60 = scmp.ne.s32.totalorder %s49, %s52
      %p61 = scmp.eq.s32.totalorder %s23, 3
      %p62 = por %p60, %p61
      %p63 = scmp.ne.s32.totalorder %s52, %s53
      %p64 = scmp.eq.s32.totalorder %s23, 0
      %p65 = por %p63, %p64
      %p66 = scmp.ne.s32.totalorder %s52, %s53
      %p67 = scmp.eq.s32.totalorder %s24, 3
      %p68 = por %p66, %p67
      %p70 = scmp.ne.s32.totalorder %s53, %s69
      %p71 = scmp.eq.s32.totalorder %s24, 0
      %p72 = por %p70, %p71
      %s74 = sadd.s32 %s73, 1
      %p77 = scmp.eq.s32.totalorder %s18, 3
      %p78 = scmp.ne.s32.totalorder %s73, %s75
      %p79 = scmp.eq.s32.totalorder %s18, 0
      %p80 = por %p78, %p79
      %p81 = scmp.ne.s32.totalorder %s73, %s75
      %p82 = scmp.eq.s32.totalorder %s23, 3
      %p83 = por %p81, %p82
      %p84 = scmp.ne.s32.totalorder %s75, %s76
      %p85 = scmp.eq.s32.totalorder %s23, 0
      %p86 = por %p84, %p85
      %p87 = scmp.ne.s32.totalorder %s75, %s76
      %p88 = scmp.eq.s32.totalorder %s24, 3
      %p89 = por %p87, %p88
      %p91 = scmp.ne.s32.totalorder %s76, %s90
      %p92 = scmp.eq.s32.totalorder %s24, 0
      %p93 = por %p91, %p92
      %s95 = sadd.s32 %s94, 1
      %p98 = scmp.eq.s32.totalorder %s18, 3
      %p99 = scmp.ne.s32.totalorder %s94, %s96
      %p100 = scmp.eq.s32.totalorder %s18, 0
      %p101 = por %p99, %p100
      %p102 = scmp.ne.s32.totalorder %s94, %s96
      %p103 = scmp.eq.s32.totalorder %s23, 3
      %p104 = por %p102, %p103
      %p105 = scmp.ne.s32.totalorder %s96, %s97
      %p106 = scmp.eq.s32.totalorder %s23, 0
      %p107 = por %p105, %p106
      %p108 = scmp.ne.s32.totalorder %s96, %s97
      %p109 = scmp.eq.s32.totalorder %s24, 3
      %p110 = por %p108, %p109
      %p112 = scmp.ne.s32.totalorder %s97, %s111
      %p113 = scmp.eq.s32.totalorder %s24, 0
      %p114 = por %p112, %p113
      %s115 = smul.u32 %s26, %s25
      %s116 = smul.u32 %s27, %s25
      %s117 = smul.u32 %s40, %s44
      %s118 = smul.u32 %s36, %s44
      %s119 = ssub.s32 %s115, %s117
      %s120 = ssub.s32 %s116, %s118
      %s121 = sor.u32 %s119, %s120
      %p122 = scmp.eq.s32.totalorder %s121, 0
      %s124 = sadd.s32 %s123, 1
      %s125 = scalar_select %p122, %s123, %s124
      %p128 = pneg %p122
      %p129 = scmp.eq.s32.totalorder %s18, 3
      %p130 = por %p128, %p129
      %p131 = scmp.ne.s32.totalorder %s123, %s126
      %p132 = scmp.eq.s32.totalorder %s18, 0
      %p133 = por %p131, %p132
      %p134 = scmp.ne.s32.totalorder %s123, %s126
      %p135 = scmp.eq.s32.totalorder %s23, 3
      %p136 = por %p134, %p135
      %p137 = scmp.ne.s32.totalorder %s126, %s127
      %p138 = scmp.eq.s32.totalorder %s23, 0
      %p139 = por %p137, %p138
      %p140 = scmp.ne.s32.totalorder %s126, %s127
      %p141 = scmp.eq.s32.totalorder %s24, 3
      %p142 = por %p140, %p141
      %p144 = scmp.ne.s32.totalorder %s127, %s143
      %p145 = scmp.eq.s32.totalorder %s24, 0
      %p146 = por %p144, %p145
      %s148 = sadd.s32 %s147, 1
      %p151 = scmp.eq.s32.totalorder %s18, 3
      %p152 = scmp.ne.s32.totalorder %s147, %s149
      %p153 = scmp.eq.s32.totalorder %s18, 0
      %p154 = por %p152, %p153
      %p155 = scmp.ne.s32.totalorder %s147, %s149
      %p156 = scmp.eq.s32.totalorder %s23, 3
      %p157 = por %p155, %p156
      %p158 = scmp.ne.s32.totalorder %s149, %s150
      %p159 = scmp.eq.s32.totalorder %s23, 0
      %p160 = por %p158, %p159
      %p161 = scmp.ne.s32.totalorder %s149, %s150
      %p162 = scmp.eq.s32.totalorder %s24, 3
      %p163 = por %p161, %p162
      %p165 = scmp.ne.s32.totalorder %s150, %s164
      %p166 = scmp.eq.s32.totalorder %s24, 0
      %p167 = por %p165, %p166
      %s169 = sadd.s32 %s168, 1
      %p172 = scmp.eq.s32.totalorder %s18, 3
      %p173 = scmp.ne.s32.totalorder %s168, %s170
      %p174 = scmp.eq.s32.totalorder %s18, 0
      %p175 = por %p173, %p174
      %p176 = scmp.ne.s32.totalorder %s168, %s170
      %p177 = scmp.eq.s32.totalorder %s23, 3
      %p178 = por %p176, %p177
      %p179 = scmp.ne.s32.totalorder %s170, %s171
      %p180 = scmp.eq.s32.totalorder %s23, 0
      %p181 = por %p179, %p180
      %p182 = scmp.ne.s32.totalorder %s170, %s171
      %p183 = scmp.eq.s32.totalorder %s24, 3
      %p184 = por %p182, %p183
      %p186 = scmp.ne.s32.totalorder %s171, %s185
      %p187 = scmp.eq.s32.totalorder %s24, 0
      %p188 = por %p186, %p187
      %p189 = scmp.le.s32.totalorder 1, %s18
      %p190 = scmp.lt.s32.totalorder %s18, 5
      %p191 = pnand %p189, %p190
      %p192 = pneg %p191
      // Predicated region
      $region9: #{tpu_custom_call.1} parent=5 // pred_check
        _
      $region10: #{tpu_custom_call.1} parent=5 // pred_check_branch
        %194 = sbr.rel (%p191) target = $region12
      $region11: #{tpu_custom_call.1} parent=5 // pred_region
        %s195 = ssub.s32 %s18, 1
        // Predicated region
        $region13: #{tpu_custom_call.1} parent=11 // pred_check
          %p196 = pneg %p86
        $region14: #{tpu_custom_call.1} parent=11 // pred_check_branch
          %198 = sbr.rel (%p196) target = $region16
        $region15: #{tpu_custom_call.1} parent=11 // pred_region
          _
        $region16: #{tpu_custom_call.1} parent=11 // pred_fallthru
          _
        // Predicated region
        $region17: #{tpu_custom_call.1} parent=11 // pred_check
          %p199 = pneg %p107
        $region18: #{tpu_custom_call.1} parent=11 // pred_check_branch
          %201 = sbr.rel (%p199) target = $region20
        $region19: #{tpu_custom_call.1} parent=11 // pred_region
          _
        $region20: #{tpu_custom_call.1} parent=11 // pred_fallthru
          _
      $region12: #{tpu_custom_call.1} parent=5 // pred_fallthru
        _
      %p202 = scmp.lt.s32.totalorder %s18, 4
      // Predicated region
      $region21: #{tpu_custom_call.1} parent=5 // pred_check
        %p203 = pneg %p202
      $region22: #{tpu_custom_call.1} parent=5 // pred_check_branch
        %205 = sbr.rel (%p203) target = $region24
      $region23: #{tpu_custom_call.1} parent=5 // pred_region
        // Predicated region
        $region25: #{tpu_custom_call.1} parent=23 // pred_check
          %p206 = pneg %p59
        $region26: #{tpu_custom_call.1} parent=23 // pred_check_branch
          %208 = sbr.rel (%p206) target = $region28
        $region27: #{tpu_custom_call.1} parent=23 // pred_region
          %s209 = sand.u32 %s49, 1
          %s210 = scalar_lea.sflag [#allocation7], %s209
          %s211 = sand.u32 %s49, 1
          %s212 = smul.addr %s211, 64
          %s213 = scalar_lea.vmem [#allocation6], %s212
          %s214 = sadd.s32 %s26, %s27
          %s215 = smul.u32 4, %s214
          %217 = vsyncadd %s210, 0
          %s218 = smul.addr %s215, 4
          %s219 = scalar_lea.hbm %s0, %s218
          %s220 = sshll.u32 %s219, 4
          %s221 = int_to_ptr.hbm [resolvable:$true] %s220
          %s222 = sshll.u32 %s213, 4
          %s223 = int_to_ptr.vmem [resolvable:$true] %s222
          %228 = dma.hbm_to_vmem [thread:$0]  %s221, 1024, %s223, %s210, 512, 256, 16
        $region28: #{tpu_custom_call.1} parent=23 // pred_fallthru
          _
      $region24: #{tpu_custom_call.1} parent=5 // pred_fallthru
        _
      %p229 = scmp.le.s32.totalorder 1, %s18
      %p230 = scmp.lt.s32.totalorder %s18, 5
      %p231 = pnand %p229, %p230
      %p232 = pneg %p231
      // Predicated region
      $region29: #{tpu_custom_call.1} parent=5 // pred_check
        _
      $region30: #{tpu_custom_call.1} parent=5 // pred_check_branch
        %234 = sbr.rel (%p231) target = $region32
      $region31: #{tpu_custom_call.1} parent=5 // pred_region
        %s235 = ssub.s32 %s18, 1
        %s236 = sand.u32 %s52, 1
        %s237 = scalar_lea.sflag [#allocation7], %s236
        %s238 = sand.u32 %s52, 1
        %s239 = smul.addr %s238, 64
        %s240 = scalar_lea.vmem [#allocation6], %s239
        // Predicated region
        $region33: #{tpu_custom_call.1} parent=31 // pred_check
          %p241 = pneg %p65
        $region34: #{tpu_custom_call.1} parent=31 // pred_check_branch
          %243 = sbr.rel (%p241) target = $region36
        $region35: #{tpu_custom_call.1} parent=31 // pred_region
          %245 = dma.done %s237, 1024
        $region36: #{tpu_custom_call.1} parent=31 // pred_fallthru
          _
        %s246 = sand.u32 %s52, 1
        %s247 = scalar_lea.sflag [#allocation7], %s246
        %s248 = sand.u32 %s52, 1
        %s249 = smul.addr %s248, 64
        %s250 = scalar_lea.vmem [#allocation6], %s249
        %p251 = pneg %p65
        %p252 = pneg %p62
        %p253 = pneg %p86
        %p254 = pneg %p83
        %p255 = pneg %p107
        %p256 = pneg %p104
        %p257 = pneg %p139
        %p258 = pneg %p136
        %s259 = sand.u32 %s126, 1
        %s260 = scalar_lea.sflag [#allocation8], %s259
        %s261 = sand.u32 %s126, 1
        %s262 = smul.addr %s261, 32
        %s263 = scalar_lea.vmem [#allocation9], %s262
        %p264 = pneg %p160
        %p265 = pneg %p157
        %p266 = pneg %p181
        %p267 = pneg %p178
        %s268 = sadd.s32 %s29, %s30
        %s269 = smul.u32 4, %s268
        %s270 = smul.u32 %s29, %s28
        %s271 = smul.u32 %s30, %s28
        %s272 = smul.u32 4, %s271
        %p274 = scmp.eq.s32.totalorder %s29, 0
        %p275 = scmp.eq.s32.totalorder %s30, 0
        %p276 = pnand %p274, %p275
        %p277 = pneg %p276
        %p278 = scmp.eq.s32.totalorder %s28, 0
        %p279 = pnand %p278, %p277
        %p280 = pneg %p279
        // Predicated region
        $region37: #{tpu_custom_call.1} parent=31 // pred_check
          _
        $region38: #{tpu_custom_call.1} parent=31 // pred_check_branch
          %282 = sbr.rel (%p279) target = $region40
        $region39: #{tpu_custom_call.1} parent=31 // pred_region
          %vm283 = vcmask 7168
          %284 = vst.msk [vmem:[#allocation2] sm:$0xff] %vm283, 0.0
          %285 = vst.msk [vmem:[#allocation3] sm:$0xff] %vm283, 0.0
        $region40: #{tpu_custom_call.1} parent=31 // pred_fallthru
          _
        %v286 = vld [vmem:[%s1] sm:$0xf]
        %v287 = vld [vmem:[%s240] sm:$0xff]
        %v288 = vld [vmem:[%s240 + $0x8] sm:$0xff]
        %v289 = vld [vmem:[%s240 + $0x10] sm:$0xff]
        %v290 = vld [vmem:[%s240 + $0x18] sm:$0xff]
        %v291 = vld [vmem:[%s240 + $0x20] sm:$0xff]
        %v292 = vld [vmem:[%s240 + $0x28] sm:$0xff]
        %v293 = vld [vmem:[%s240 + $0x30] sm:$0xff]
        %v294 = vld [vmem:[%s240 + $0x38] sm:$0xff]
        %v303 = vunpack.c.l.b16 %v287
        %v304 = vunpack.c.h.b16 %v287
        %v305 = vunpack.c.l.b16 %v288
        %v306 = vunpack.c.h.b16 %v288
        %v307 = vunpack.c.l.b16 %v289
        %v308 = vunpack.c.h.b16 %v289
        %v309 = vunpack.c.l.b16 %v290
        %v310 = vunpack.c.h.b16 %v290
        %v311 = vunpack.c.l.b16 %v291
        %v312 = vunpack.c.h.b16 %v291
        %v313 = vunpack.c.l.b16 %v292
        %v314 = vunpack.c.h.b16 %v292
        %v315 = vunpack.c.l.b16 %v293
        %v316 = vunpack.c.h.b16 %v293
        %v317 = vunpack.c.l.b16 %v294
        %v318 = vunpack.c.h.b16 %v294
        %v319 = vpack.c.b16 %v307, %v303
        %v320 = vpack.c.b16 %v308, %v304
        %v321 = vpack.c.b16 %v309, %v305
        %v322 = vpack.c.b16 %v310, %v306
        %v323 = vpack.c.b16 %v315, %v311
        %v324 = vpack.c.b16 %v316, %v312
        %v325 = vpack.c.b16 %v317, %v313
        %v326 = vpack.c.b16 %v318, %v314
        %vm335 = vcmask 261120
        %v337 = vsel %vm335, %v286, 0
        %339 = vmatpush.bf16.msra.mxu0 0
        %340 = vmatpush.bf16.msra.mxu0 0
        %341 = vmatpush.bf16.msra.mxu0 0
        %342 = vmatpush.bf16.msra.mxu0 0
        %343 = vmatpush.bf16.msra.mxu0 0
        %344 = vmatpush.bf16.msra.mxu0 0
        %345 = vmatpush.bf16.msra.mxu0 %v323
        %346 = vmatpush.bf16.msra.mxu0 %v319
        %347 = vmatmul.bf16.gmra.mxu0 %v337
        %v348 = vpop.f32.mrf.mxu0
        %v349 = vadd.f32 0.0, %v348
        %v350 = vpop.f32.mrf.mxu0
        %351 = vdwg.mxu0
        %352 = vmatpush.bf16.msra.mxu0 0
        %353 = vmatpush.bf16.msra.mxu0 0
        %354 = vmatpush.bf16.msra.mxu0 0
        %355 = vmatpush.bf16.msra.mxu0 0
        %356 = vmatpush.bf16.msra.mxu0 0
        %357 = vmatpush.bf16.msra.mxu0 0
        %358 = vmatpush.bf16.msra.mxu0 %v324
        %359 = vmatpush.bf16.msra.mxu0 %v320
        %360 = vmatmul.bf16.gmra.mxu0 %v337
        %v361 = vpop.f32.mrf.mxu0
        %v362 = vadd.f32 0.0, %v361
        %v363 = vpop.f32.mrf.mxu0
        %364 = vdwg.mxu0
        %365 = vmatpush.bf16.msra.mxu0 0
        %366 = vmatpush.bf16.msra.mxu0 0
        %367 = vmatpush.bf16.msra.mxu0 0
        %368 = vmatpush.bf16.msra.mxu0 0
        %369 = vmatpush.bf16.msra.mxu0 0
        %370 = vmatpush.bf16.msra.mxu0 0
        %371 = vmatpush.bf16.msra.mxu0 %v325
        %372 = vmatpush.bf16.msra.mxu0 %v321
        %373 = vmatmul.bf16.gmra.mxu0 %v337
        %v374 = vpop.f32.mrf.mxu0
        %v375 = vadd.f32 0.0, %v374
        %v376 = vpop.f32.mrf.mxu0
        %377 = vdwg.mxu0
        %378 = vmatpush.bf16.msra.mxu0 0
        %379 = vmatpush.bf16.msra.mxu0 0
        %380 = vmatpush.bf16.msra.mxu0 0
        %381 = vmatpush.bf16.msra.mxu0 0
        %382 = vmatpush.bf16.msra.mxu0 0
        %383 = vmatpush.bf16.msra.mxu0 0
        %384 = vmatpush.bf16.msra.mxu0 %v326
        %385 = vmatpush.bf16.msra.mxu0 %v322
        %386 = vmatmul.bf16.gmra.mxu0 %v337
        %v387 = vpop.f32.mrf.mxu0
        %v388 = vadd.f32 0.0, %v387
        %v389 = vpop.f32.mrf.mxu0
        %390 = vdwg.mxu0
        // Predicated region
        $region41: #{tpu_custom_call.1} parent=31 // pred_check
          %p391 = pneg %p278
        $region42: #{tpu_custom_call.1} parent=31 // pred_check_branch
          %393 = sbr.rel (%p391) target = $region44
        $region43: #{tpu_custom_call.1} parent=31 // pred_region
          %v394 = vld [vmem:[#allocation2] sm:$0xff]
          %v395 = vadd.f32 %v349, %v362
          %v396 = vadd.f32 %v395, %v375
          %v397 = vadd.f32 %v396, %v388
          %398 = vadd.xlane.f32.xlu0 %v397
          %v399 = vpop.xlane.xlu0 %398
          %v400 = vadd.f32 %v394, %v399
          %vm401 = vcmask 7168
          %402 = vst.msk [vmem:[#allocation2] sm:$0xff] %vm401, %v400
          %v403 = vld [vmem:[#allocation3] sm:$0xff]
          %v404 = vmul.f32 %v349, %v349
          %v405 = vmul.f32 %v362, %v362
          %v406 = vmul.f32 %v375, %v375
          %v407 = vmul.f32 %v388, %v388
          %v408 = vadd.f32 %v404, %v405
          %v409 = vadd.f32 %v408, %v406
          %v410 = vadd.f32 %v409, %v407
          %411 = vadd.xlane.f32.xlu0 %v410
          %v412 = vpop.xlane.xlu0 %411
          %v413 = vadd.f32 %v403, %v412
          %414 = vst.msk [vmem:[#allocation3] sm:$0xff] %vm401, %v413
        $region44: #{tpu_custom_call.1} parent=31 // pred_fallthru
          _
        %p415 = scmp.eq.s32.totalorder %s28, 1
        %p416 = pnand %p415, %p277
        %p417 = pneg %p416
        // Predicated region
        $region45: #{tpu_custom_call.1} parent=31 // pred_check
          _
        $region46: #{tpu_custom_call.1} parent=31 // pred_check_branch
          %419 = sbr.rel (%p416) target = $region48
        $region47: #{tpu_custom_call.1} parent=31 // pred_region
          %v420 = vld [vmem:[#allocation2] sm:$0xff]
          %v421 = vmul.f32 %v420, 0.0009765625
          %v422 = vld [vmem:[#allocation3] sm:$0xff]
          %v423 = vmul.f32 %v422, 0.0009765625
          %v424 = vmul.f32 %v421, %v421
          %v425 = vsub.f32 %v423, %v424
          %v426 = vmax.f32 %v425, 0.0
          %v427 = vadd.f32 %v426, 1e-05
          %v428 = vrsqrt.pop %v427
          %v429 = vmul.f32 %v428, %v427
          %v430 = vmul.f32 %v429, %v428
          %v431 = vmul.f32 0.5, %v430
          %v432 = vsub.f32 1.5, %v431
          %v433 = vmul.f32 %v428, %v432
          %vm434 = vweird.f32 %v427
          %vm435 = vweird.f32 %v428
          %vm436 = vmor %vm434, %vm435
          %v437 = vsel %vm436, %v428, %v433
          %v438 = vld [vmem:[%s2] sm:$0xff]
          %v439 = vmul.f32 %v438, %v437
          %vm440 = vcmask 7168
          %441 = vst.msk [vmem:[#allocation4] sm:$0xff] %vm440, %v439
          %v442 = vmul.f32 %v421, %v439
          %444 = vrot.lane.b32.xlu0 %v442, 1
          %v445 = vpop.permute.xlu0 %444
          %v447 = vsub.f32 %v438, %v445
          %449 = vrot.lane.b32.xlu0 %v447, 127
          %v450 = vpop.permute.xlu0 %449
          %452 = vst.msk [vmem:[#allocation5] sm:$0xff] %vm440, %v450
          %453 = vst.msk [vmem:[%s4] sm:$0xff] %vm440, %v421
          %454 = vst.msk [vmem:[%s5] sm:$0xff] %vm440, %v426
        $region48: #{tpu_custom_call.1} parent=31 // pred_fallthru
          _
        // Predicated region
        $region49: #{tpu_custom_call.1} parent=31 // pred_check
          %p455 = pneg %p415
        $region50: #{tpu_custom_call.1} parent=31 // pred_check_branch
          %457 = sbr.rel (%p455) target = $region52
        $region51: #{tpu_custom_call.1} parent=31 // pred_region
          %v458 = vld [vmem:[%s2] sm:$0xff]
          %v459 = vld [vmem:[#allocation4] sm:$0xff]
          %461 = vset.pattern.permute.xlu0 0
          %462 = vperm.xlu0 %461, %v459
          %v463 = vpop.permute.xlu0 %462
          %v465 = vmul.f32 %v349, %v463
          %v466 = vmul.f32 %v362, %v463
          %v467 = vmul.f32 %v375, %v463
          %v468 = vmul.f32 %v388, %v463
          %v469 = vld [vmem:[#allocation5] sm:$0xff]
          %471 = vset.pattern.permute.xlu0 0
          %472 = vperm.xlu0 %471, %v469
          %v473 = vpop.permute.xlu0 %472
          %v475 = vadd.f32 %v465, %v473
          %v476 = vadd.f32 %v466, %v473
          %v477 = vadd.f32 %v467, %v473
          %v478 = vadd.f32 %v468, %v473
          %vm479 = vcmp.ge.f32.partialorder %v475, 0.0
          %vm480 = vcmp.ge.f32.partialorder %v476, 0.0
          %vm481 = vcmp.ge.f32.partialorder %v477, 0.0
          %vm482 = vcmp.ge.f32.partialorder %v478, 0.0
          %484 = vset.pattern.permute.xlu0 2
          %485 = vperm.xlu0 %484, %v458
          %v486 = vpop.permute.xlu0 %485
          %v488 = vmul.f32 %v486, %v475
          %v489 = vmul.f32 %v486, %v476
          %v490 = vmul.f32 %v486, %v477
          %v491 = vmul.f32 %v486, %v478
          %v492 = vsel %vm479, %v475, %v488
          %v493 = vsel %vm480, %v476, %v489
          %v494 = vsel %vm481, %v477, %v490
          %v495 = vsel %vm482, %v478, %v491
          %496 = vst [vmem:[%s263] sm:$0xff] %v492
          %497 = vst [vmem:[%s263 + $0x8] sm:$0xff] %v493
          %498 = vst [vmem:[%s263 + $0x10] sm:$0xff] %v494
          %499 = vst [vmem:[%s263 + $0x18] sm:$0xff] %v495
        $region52: #{tpu_custom_call.1} parent=31 // pred_fallthru
          _
        %s500 = sand.u32 %s126, 1
        %s501 = scalar_lea.sflag [#allocation8], %s500
        %s502 = sand.u32 %s126, 1
        %s503 = smul.addr %s502, 32
        %s504 = scalar_lea.vmem [#allocation9], %s503
        // Predicated region
        $region53: #{tpu_custom_call.1} parent=31 // pred_check
          %p505 = pneg %p136
        $region54: #{tpu_custom_call.1} parent=31 // pred_check_branch
          %507 = sbr.rel (%p505) target = $region56
        $region55: #{tpu_custom_call.1} parent=31 // pred_region
          %s508 = smul.u32 %s29, %s28
          %s509 = smul.u32 %s30, %s28
          %s510 = smul.u32 4, %s509
          %512 = vsyncadd %s501, 0
          %s513 = smul.addr %s508, 4
          %s514 = sadd.s32 %s510, %s513
          %s515 = smul.addr %s514, 8
          %s516 = scalar_lea.hbm %s3, %s515
          %s518 = sshll.u32 %s504, 4
          %s519 = int_to_ptr.vmem [resolvable:$true] %s518
          %s520 = sshll.u32 %s516, 4
          %s521 = int_to_ptr.hbm [resolvable:$true] %s520
          %523 = dma.vmem_to_hbm [thread:$0]  %s519, 512, %s521, %s501
        $region56: #{tpu_custom_call.1} parent=31 // pred_fallthru
          _
        // Predicated region
        $region57: #{tpu_custom_call.1} parent=31 // pred_check
          %p524 = pneg %p157
        $region58: #{tpu_custom_call.1} parent=31 // pred_check_branch
          %526 = sbr.rel (%p524) target = $region60
        $region59: #{tpu_custom_call.1} parent=31 // pred_region
          _
        $region60: #{tpu_custom_call.1} parent=31 // pred_fallthru
          _
        // Predicated region
        $region61: #{tpu_custom_call.1} parent=31 // pred_check
          %p527 = pneg %p178
        $region62: #{tpu_custom_call.1} parent=31 // pred_check_branch
          %529 = sbr.rel (%p527) target = $region64
        $region63: #{tpu_custom_call.1} parent=31 // pred_region
          _
        $region64: #{tpu_custom_call.1} parent=31 // pred_fallthru
          _
        // Predicated region
        $region65: #{tpu_custom_call.1} parent=31 // pred_check
          %p530 = pneg %p157
        $region66: #{tpu_custom_call.1} parent=31 // pred_check_branch
          %532 = sbr.rel (%p530) target = $region68
        $region67: #{tpu_custom_call.1} parent=31 // pred_region
          _
        $region68: #{tpu_custom_call.1} parent=31 // pred_fallthru
          _
        // Predicated region
        $region69: #{tpu_custom_call.1} parent=31 // pred_check
          %p533 = pneg %p178
        $region70: #{tpu_custom_call.1} parent=31 // pred_check_branch
          %535 = sbr.rel (%p533) target = $region72
        $region71: #{tpu_custom_call.1} parent=31 // pred_region
          _
        $region72: #{tpu_custom_call.1} parent=31 // pred_fallthru
          _
      $region32: #{tpu_custom_call.1} parent=5 // pred_fallthru
        _
      %p536 = scmp.le.s32.totalorder 2, %s18
      // Predicated region
      $region73: #{tpu_custom_call.1} parent=5 // pred_check
        %p537 = pneg %p536
      $region74: #{tpu_custom_call.1} parent=5 // pred_check_branch
        %539 = sbr.rel (%p537) target = $region76
      $region75: #{tpu_custom_call.1} parent=5 // pred_region
        %s540 = ssub.s32 %s18, 2
        // Predicated region
        $region77: #{tpu_custom_call.1} parent=75 // pred_check
          %p541 = pneg %p142
        $region78: #{tpu_custom_call.1} parent=75 // pred_check_branch
          %543 = sbr.rel (%p541) target = $region80
        $region79: #{tpu_custom_call.1} parent=75 // pred_region
          %s544 = sand.u32 %s127, 1
          %s545 = scalar_lea.sflag [#allocation8], %s544
          %s546 = sand.u32 %s127, 1
          %s547 = smul.addr %s546, 32
          %s548 = scalar_lea.vmem [#allocation9], %s547
          %550 = dma.done %s545, 512
        $region80: #{tpu_custom_call.1} parent=75 // pred_fallthru
          _
      $region76: #{tpu_custom_call.1} parent=5 // pred_fallthru
        _
    $region6: #{tpu_custom_call.1} parent=1 // loop_footer
      %s22 = sadd.s32 1, %s18
    $region7: #{tpu_custom_call.1} parent=1 // loop_footer_branch
      %17 = sbr.rel target = $region3
    $region8: #{tpu_custom_call.1} parent=1 // loop_exit
      _
    %551 = vsyncpa [#allocation7], 1
    %s552 = scalar_lea.sflag [#allocation7], 1
    %553 = vsyncpa %s552, 1
    %554 = vsyncpa [#allocation8], 1
    %s555 = scalar_lea.sflag [#allocation8], 1
    %556 = vsyncpa %s555, 1

</llo_original>
